<compile_context>
chip_gen: v7x
topology: tpu7x:2x2x1
jax: 0.10.0
libtpu: 0.0.40
codegen_flags: <defaults>
</compile_context>

<pallas_src>
import functools
from typing import NamedTuple

import jax
import jax.numpy as jnp
from jax import lax
from jax.experimental import pallas as pl
from jax.experimental.pallas import tpu as pltpu

LANE = 128      # lane width (last-dim granularity)
SUBLANE = 8     # sublane granularity (second-to-last dim)


def _round_up(n, m):
    return ((n + m - 1) // m) * m


class GNetParams(NamedTuple):
    w1: jax.Array   # [in_dim, hid_p]  bf16  (hidden lane-padded to 128)
    b1: jax.Array   # [1, hid_p]       f32
    w2: jax.Array   # [hid_p, out_p]   bf16
    b2: jax.Array   # [1, out_p]       f32
    in_dim: int
    hid_dim: int
    out_dim: int


def prepare_gnet_params(w1, b1, w2, b2):
    """One-time pad/cast of the parameters (hoisted out of the forward path)."""
    in_dim, hid_dim = w1.shape
    out_dim = w2.shape[1]
    hid_p = _round_up(hid_dim, LANE)
    out_p = _round_up(out_dim, LANE)
    # Zero padding is semantics-preserving: padded hidden lanes are exactly 0
    # after bias(0)+LeakyReLU, and padded w2 rows are 0, so they never
    # contaminate real lanes.
    w1p = jnp.pad(w1.astype(jnp.bfloat16), ((0, 0), (0, hid_p - hid_dim)))
    b1p = jnp.pad(b1.astype(jnp.float32), (0, hid_p - hid_dim)).reshape(1, hid_p)
    w2p = jnp.pad(w2.astype(jnp.bfloat16),
                  ((0, hid_p - hid_dim), (0, out_p - out_dim)))
    b2p = jnp.pad(b2.astype(jnp.float32), (0, out_p - out_dim)).reshape(1, out_p)
    return GNetParams(w1p, b1p, w2p, b2p, in_dim, hid_dim, out_dim)


def _gnet_kernel(x_ref, w1_ref, b1_ref, w2_ref, b2_ref, o_ref):
    # fc1: x arrives at native dtype (e.g. f32) and is cast to bf16 here,
    # so the wrapper never does a separate pad/cast pass over x.
    xb = x_ref[...].astype(jnp.bfloat16)
    h = jnp.dot(xb, w1_ref[...], preferred_element_type=jnp.float32)
    h = h + b1_ref[...]
    h = jnp.where(h > 0, h, 0.01 * h)            # LeakyReLU (PyTorch default slope)
    # fc2: bf16 MXU inputs, f32 accumulation; ReLU in f32; bf16 store.
    y = jnp.dot(h.astype(jnp.bfloat16), w2_ref[...],
                preferred_element_type=jnp.float32)
    y = y + b2_ref[...]
    o_ref[...] = jnp.maximum(y, 0.0).astype(o_ref.dtype)


def _gnet_kernel_chunked(x_ref, w1_ref, b1_ref, w2_ref, b2_ref, o_ref, *,
                         hid_chunk):
    # Large-hidden variant: never materialize the full f32 hidden activation;
    # process hid_chunk columns of fc1 at a time and accumulate their fc2
    # contribution, keeping the live activation small (no VMEM spill).
    n_chunks = w1_ref.shape[1] // hid_chunk
    xb = x_ref[...].astype(jnp.bfloat16)

    def body(c, y):
        off = pl.multiple_of(c * hid_chunk, hid_chunk)
        h = jnp.dot(xb, w1_ref[:, pl.ds(off, hid_chunk)],
                    preferred_element_type=jnp.float32)
        h = h + b1_ref[:, pl.ds(off, hid_chunk)]
        h = jnp.where(h > 0, h, 0.01 * h)
        return y + jnp.dot(h.astype(jnp.bfloat16),
                           w2_ref[pl.ds(off, hid_chunk), :],
                           preferred_element_type=jnp.float32)

    y = lax.fori_loop(0, n_chunks, body,
                      jnp.zeros((x_ref.shape[0], o_ref.shape[1]), jnp.float32))
    y = y + b2_ref[...]
    o_ref[...] = jnp.maximum(y, 0.0).astype(o_ref.dtype)


def _default_tile_b():
    try:
        kind = jax.devices()[0].device_kind.lower()
    except Exception:
        return 512
    # v6e (128 MiB VMEM) benefits from bigger batch tiles; keep 512 on v5e
    # (16 MiB scoped default) and v7x (64 MiB physical VMEM).
    return 1024 if "v6" in kind else 512


def g_net_forward(params: GNetParams, x, *, tile_b=None):
    """G_Net forward.  x: [B, in_dim] float.  Returns [B, out_dim] bf16."""
    B, in_dim = x.shape
    assert in_dim == params.in_dim, (in_dim, params.in_dim)
    hid_p = params.w1.shape[1]
    out_p = params.w2.shape[1]
    out_dim = params.out_dim

    if tile_b is None:
        tile_b = _default_tile_b()

    # Batch tile: multiple of 8 sublanes; aim for >= 2 grid programs whenever
    # the batch allows it so ("parallel",) can shard across v7x's 2 TensorCores.
    B_r = _round_up(B, SUBLANE)
    if B_r > SUBLANE:
        tb = min(tile_b, _round_up((B_r + 1) // 2, SUBLANE))
    else:
        tb = B_r
    B_p = _round_up(B, tb)

    # Only batch padding, and only when needed; no feature padding / dtype cast
    # of x in the wrapper.
    x_in = x if B_p == B else jnp.pad(x, ((0, B_p - B), (0, 0)))

    # Pick the kernel: chunk the hidden dim in-kernel if the f32 activation for
    # one batch tile would be large (> ~2 MiB).
    if tb * hid_p * 4 > (2 << 20):
        hid_chunk = 512 if hid_p % 512 == 0 else (256 if hid_p % 256 == 0 else 128)
        kernel = functools.partial(_gnet_kernel_chunked, hid_chunk=hid_chunk)
    else:
        kernel = _gnet_kernel

    # Explicit scoped-VMEM limit: >= 32 MiB (v5e default is only 16 MiB),
    # <= 64 MiB (v7x physical VMEM).
    weight_bytes = sum(int(a.size) * a.dtype.itemsize
                       for a in (params.w1, params.b1, params.w2, params.b2))
    need = (2 * weight_bytes                         # worst case: double-buffered weights
            + 2 * tb * in_dim * x.dtype.itemsize     # double-buffered x tiles
            + 2 * tb * out_p * 2                     # double-buffered bf16 out tiles
            + tb * hid_p * 6 + tb * out_p * 4        # in-kernel intermediates
            + (4 << 20))                             # headroom
    vmem_limit = int(min(max(need, 32 << 20), 64 << 20))

    def run(weight_mode):
        def wspec(shape):
            if weight_mode is None:
                return pl.BlockSpec(shape, lambda i: (0, 0))
            return pl.BlockSpec(shape, lambda i: (0, 0), pipeline_mode=weight_mode)

        return pl.pallas_call(
            kernel,
            out_shape=jax.ShapeDtypeStruct((B_p, out_p), jnp.bfloat16),
            grid=(B_p // tb,),
            in_specs=[
                pl.BlockSpec((tb, in_dim), lambda i: (i, 0)),  # x: tiled over batch
                wspec((in_dim, hid_p)),                        # w1: VMEM-resident
                wspec((1, hid_p)),                             # b1: VMEM-resident
                wspec((hid_p, out_p)),                         # w2: VMEM-resident
                wspec((1, out_p)),                             # b2: VMEM-resident
            ],
            out_specs=pl.BlockSpec((tb, out_p), lambda i: (i, 0)),
            compiler_params=pltpu.CompilerParams(
                dimension_semantics=("parallel",),             # v7x: shard batch grid
                vmem_limit_bytes=vmem_limit),
        )(x_in, params.w1, params.b1, params.w2, params.b2)

    try:
        # Single-buffer the resident weights/biases (constant index_maps mean
        # there is nothing to double-buffer; this halves their VMEM footprint,
        # which matters on v7x's 64 MiB VMEM).
        out_padded = run(pl.Buffered(1))
    except Exception:
        # Fallback for runtimes that reject pipeline_mode on these specs.
        out_padded = run(None)

    if B_p != B or out_p != out_dim:
        # Padded batch rows hold relu(b2) and padded lanes hold 0 — slice them off.
        return out_padded[:B, :out_dim]
    return out_padded


def xavier_normal(key, fan_in, fan_out):
    # matches torch.nn.init.xavier_normal_: std = sqrt(2 / (fan_in + fan_out))
    std = jnp.sqrt(2.0 / (fan_in + fan_out))
    return jax.random.normal(key, (fan_in, fan_out), dtype=jnp.float32) * std


if __name__ == "__main__":
    # Small shapes consistent with the module's forward.
    batch, input_dim, hidden_dim, output_dim = 8, 16, 32, 16

    key = jax.random.PRNGKey(0)
    k_x, k_w1, k_w2 = jax.random.split(key, 3)

    x = jax.random.normal(k_x, (batch, input_dim), dtype=jnp.float32)

    # Deterministic parameter init matching weight_init (xavier_normal, zero bias).
    w1 = xavier_normal(k_w1, input_dim, hidden_dim)      # [in, hidden]
    b1 = jnp.zeros((hidden_dim,), dtype=jnp.float32)
    w2 = xavier_normal(k_w2, hidden_dim, output_dim)     # [hidden, out]
    b2 = jnp.zeros((output_dim,), dtype=jnp.float32)

    # One-time parameter preparation (pad/cast hoisted out of the forward path).
    params = prepare_gnet_params(w1, b1, w2, b2)
    jax.block_until_ready((params.w1, params.b1, params.w2, params.b2))

    out = g_net_forward(params, x)
    jax.block_until_ready(out)

    # Full-f32 reference; tolerance reflects bf16 MXU inputs + bf16 output.
    h_ref = x @ w1 + b1
    h_ref = jnp.where(h_ref > 0, h_ref, 0.01 * h_ref)
    y_ref = jnp.maximum(h_ref @ w2 + b2, 0.0)

    assert out.shape == y_ref.shape, f"shape mismatch {out.shape} vs {y_ref.shape}"
    assert jnp.allclose(out.astype(jnp.float32), y_ref, atol=3e-2, rtol=3e-2), \
        "mismatch vs reference"

    print("KERNEL_OK")
</pallas_src>

<mosaic_0001>
module attributes {stable_mosaic.version = 11 : i64} {
  func.func @_gnet_kernel(%arg0: i32, %arg1: memref<8x16xf32, #tpu.memory_space<vmem>>, %arg2: memref<16x128xbf16, #tpu.memory_space<vmem>>, %arg3: memref<1x128xf32, #tpu.memory_space<vmem>>, %arg4: memref<128x128xbf16, #tpu.memory_space<vmem>>, %arg5: memref<1x128xf32, #tpu.memory_space<vmem>>, %arg6: memref<8x128xbf16, #tpu.memory_space<vmem>>) attributes {dimension_semantics = [#tpu.dimension_semantics<parallel>], iteration_bounds = array<i64: 1>, scalar_prefetch = 0 : i64, scratch_operands = 0 : i64, tpu.core_type = #tpu.core_type<tc>, window_params = [{transform_indices = @transform_0, window_bounds = array<i64: 8, 16>}, {pipeline_mode = #tpu.pipeline_mode<synchronous>, transform_indices = @transform_1, window_bounds = array<i64: 16, 128>}, {pipeline_mode = #tpu.pipeline_mode<synchronous>, transform_indices = @transform_2, window_bounds = array<i64: 1, 128>}, {pipeline_mode = #tpu.pipeline_mode<synchronous>, transform_indices = @transform_3, window_bounds = array<i64: 128, 128>}, {pipeline_mode = #tpu.pipeline_mode<synchronous>, transform_indices = @transform_4, window_bounds = array<i64: 1, 128>}, {transform_indices = @transform_5, window_bounds = array<i64: 8, 128>}]} {
    %c0 = arith.constant 0 : index
    %c0_0 = arith.constant 0 : index
    %0 = vector.load %arg1[%c0, %c0_0] : memref<8x16xf32, #tpu.memory_space<vmem>>, vector<8x16xf32>
    %1 = arith.truncf %0 : vector<8x16xf32> to vector<8x16xbf16>
    %c0_1 = arith.constant 0 : index
    %c0_2 = arith.constant 0 : index
    %2 = vector.load %arg2[%c0_1, %c0_2] : memref<16x128xbf16, #tpu.memory_space<vmem>>, vector<16x128xbf16>
    %cst = arith.constant dense<0.000000e+00> : vector<8x128xf32>
    %3 = tpu.matmul %1, %2, %cst {dimension_numbers = #tpu.dot_dimension_numbers<[1], [0], [0], [1], [0, 0, 1, 1], [], []>} : vector<8x16xbf16>, vector<16x128xbf16>, vector<8x128xf32> -> vector<8x128xf32>
    %c0_3 = arith.constant 0 : index
    %c0_4 = arith.constant 0 : index
    %4 = vector.load %arg3[%c0_3, %c0_4] : memref<1x128xf32, #tpu.memory_space<vmem>>, vector<1x128xf32>
    %5 = vector.broadcast %4 : vector<1x128xf32> to vector<8x128xf32>
    %6 = arith.addf %3, %5 : vector<8x128xf32>
    %cst_5 = arith.constant 0.000000e+00 : f32
    %7 = vector.broadcast %cst_5 : f32 to vector<8x128xf32>
    %8 = arith.cmpf ogt, %6, %7 : vector<8x128xf32>
    %cst_6 = arith.constant 0.00999999977 : f32
    %9 = vector.broadcast %cst_6 : f32 to vector<8x128xf32>
    %10 = arith.mulf %9, %6 : vector<8x128xf32>
    %11 = arith.select %8, %6, %10 : vector<8x128xi1>, vector<8x128xf32>
    %12 = arith.truncf %11 : vector<8x128xf32> to vector<8x128xbf16>
    %c0_7 = arith.constant 0 : index
    %c0_8 = arith.constant 0 : index
    %13 = vector.load %arg4[%c0_7, %c0_8] : memref<128x128xbf16, #tpu.memory_space<vmem>>, vector<128x128xbf16>
    %cst_9 = arith.constant dense<0.000000e+00> : vector<8x128xf32>
    %14 = tpu.matmul %12, %13, %cst_9 {dimension_numbers = #tpu.dot_dimension_numbers<[1], [0], [0], [1], [0, 0, 1, 1], [], []>} : vector<8x128xbf16>, vector<128x128xbf16>, vector<8x128xf32> -> vector<8x128xf32>
    %c0_10 = arith.constant 0 : index
    %c0_11 = arith.constant 0 : index
    %15 = vector.load %arg5[%c0_10, %c0_11] : memref<1x128xf32, #tpu.memory_space<vmem>>, vector<1x128xf32>
    %16 = vector.broadcast %15 : vector<1x128xf32> to vector<8x128xf32>
    %17 = arith.addf %14, %16 : vector<8x128xf32>
    %cst_12 = arith.constant 0.000000e+00 : f32
    %18 = vector.broadcast %cst_12 : f32 to vector<8x128xf32>
    %19 = arith.maximumf %17, %18 : vector<8x128xf32>
    %20 = arith.truncf %19 : vector<8x128xf32> to vector<8x128xbf16>
    %c0_13 = arith.constant 0 : index
    %c0_14 = arith.constant 0 : index
    %21 = vector.load %arg6[%c0_13, %c0_14] : memref<8x128xbf16, #tpu.memory_space<vmem>>, vector<8x128xbf16>
    tpu.vector_store %arg6[%c0_13, %c0_14], %20 {strides = array<i32>} : memref<8x128xbf16, #tpu.memory_space<vmem>>, vector<8x128xbf16>,
    return
  }
  func.func @transform_0(%arg0: i32) -> (i32, i32) {
    %c0_i32 = arith.constant 0 : i32
    %c0_i32_0 = arith.constant 0 : i32
    return %arg0, %c0_i32 : i32, i32
  }
  func.func @transform_1(%arg0: i32) -> (i32, i32) {
    %c0_i32 = arith.constant 0 : i32
    %c0_i32_0 = arith.constant 0 : i32
    %c0_i32_1 = arith.constant 0 : i32
    return %c0_i32, %c0_i32_0 : i32, i32
  }
  func.func @transform_2(%arg0: i32) -> (i32, i32) {
    %c0_i32 = arith.constant 0 : i32
    %c0_i32_0 = arith.constant 0 : i32
    %c0_i32_1 = arith.constant 0 : i32
    return %c0_i32, %c0_i32_0 : i32, i32
  }
  func.func @transform_3(%arg0: i32) -> (i32, i32) {
    %c0_i32 = arith.constant 0 : i32
    %c0_i32_0 = arith.constant 0 : i32
    %c0_i32_1 = arith.constant 0 : i32
    return %c0_i32, %c0_i32_0 : i32, i32
  }
  func.func @transform_4(%arg0: i32) -> (i32, i32) {
    %c0_i32 = arith.constant 0 : i32
    %c0_i32_0 = arith.constant 0 : i32
    %c0_i32_1 = arith.constant 0 : i32
    return %c0_i32, %c0_i32_0 : i32, i32
  }
  func.func @transform_5(%arg0: i32) -> (i32, i32) {
    %c0_i32 = arith.constant 0 : i32
    %c0_i32_0 = arith.constant 0 : i32
    return %arg0, %c0_i32 : i32, i32
  }
}

module attributes {stable_mosaic.version = 11 : i64} {
  func.func @_gnet_kernel(%arg0: i32, %arg1: memref<8x16xf32, #tpu.memory_space<vmem>>, %arg2: memref<16x128xbf16, #tpu.memory_space<vmem>>, %arg3: memref<1x128xf32, #tpu.memory_space<vmem>>, %arg4: memref<128x128xbf16, #tpu.memory_space<vmem>>, %arg5: memref<1x128xf32, #tpu.memory_space<vmem>>, %arg6: memref<8x128xbf16, #tpu.memory_space<vmem>>) attributes {dimension_semantics = [#tpu.dimension_semantics<parallel>], iteration_bounds = array<i64: 1>, scalar_prefetch = 0 : i64, scratch_operands = 0 : i64, tpu.core_type = #tpu.core_type<tc>, window_params = [{transform_indices = @transform_0, window_bounds = array<i64: 8, 16>}, {pipeline_mode = #tpu.pipeline_mode<synchronous>, transform_indices = @transform_1, window_bounds = array<i64: 16, 128>}, {pipeline_mode = #tpu.pipeline_mode<synchronous>, transform_indices = @transform_2, window_bounds = array<i64: 1, 128>}, {pipeline_mode = #tpu.pipeline_mode<synchronous>, transform_indices = @transform_3, window_bounds = array<i64: 128, 128>}, {pipeline_mode = #tpu.pipeline_mode<synchronous>, transform_indices = @transform_4, window_bounds = array<i64: 1, 128>}, {transform_indices = @transform_5, window_bounds = array<i64: 8, 128>}]} {
    %c0 = arith.constant 0 : index
    %c0_0 = arith.constant 0 : index
    %0 = vector.load %arg1[%c0, %c0_0] : memref<8x16xf32, #tpu.memory_space<vmem>>, vector<8x16xf32>
    %1 = arith.truncf %0 : vector<8x16xf32> to vector<8x16xbf16>
    %c0_1 = arith.constant 0 : index
    %c0_2 = arith.constant 0 : index
    %2 = vector.load %arg2[%c0_1, %c0_2] : memref<16x128xbf16, #tpu.memory_space<vmem>>, vector<16x128xbf16>
    %cst = arith.constant dense<0.000000e+00> : vector<8x128xf32>
    %3 = tpu.matmul %1, %2, %cst {dimension_numbers = #tpu.dot_dimension_numbers<[1], [0], [0], [1], [0, 0, 1, 1], [], []>} : vector<8x16xbf16>, vector<16x128xbf16>, vector<8x128xf32> -> vector<8x128xf32>
    %c0_3 = arith.constant 0 : index
    %c0_4 = arith.constant 0 : index
    %4 = vector.load %arg3[%c0_3, %c0_4] : memref<1x128xf32, #tpu.memory_space<vmem>>, vector<1x128xf32>
    %5 = vector.broadcast %4 : vector<1x128xf32> to vector<8x128xf32>
    %6 = arith.addf %3, %5 : vector<8x128xf32>
    %cst_5 = arith.constant 0.000000e+00 : f32
    %7 = vector.broadcast %cst_5 : f32 to vector<8x128xf32>
    %8 = arith.cmpf ogt, %6, %7 : vector<8x128xf32>
    %cst_6 = arith.constant 0.00999999977 : f32
    %9 = vector.broadcast %cst_6 : f32 to vector<8x128xf32>
    %10 = arith.mulf %9, %6 : vector<8x128xf32>
    %11 = arith.select %8, %6, %10 : vector<8x128xi1>, vector<8x128xf32>
    %12 = arith.truncf %11 : vector<8x128xf32> to vector<8x128xbf16>
    %c0_7 = arith.constant 0 : index
    %c0_8 = arith.constant 0 : index
    %13 = vector.load %arg4[%c0_7, %c0_8] : memref<128x128xbf16, #tpu.memory_space<vmem>>, vector<128x128xbf16>
    %cst_9 = arith.constant dense<0.000000e+00> : vector<8x128xf32>
    %14 = tpu.matmul %12, %13, %cst_9 {dimension_numbers = #tpu.dot_dimension_numbers<[1], [0], [0], [1], [0, 0, 1, 1], [], []>} : vector<8x128xbf16>, vector<128x128xbf16>, vector<8x128xf32> -> vector<8x128xf32>
    %c0_10 = arith.constant 0 : index
    %c0_11 = arith.constant 0 : index
    %15 = vector.load %arg5[%c0_10, %c0_11] : memref<1x128xf32, #tpu.memory_space<vmem>>, vector<1x128xf32>
    %16 = vector.broadcast %15 : vector<1x128xf32> to vector<8x128xf32>
    %17 = arith.addf %14, %16 : vector<8x128xf32>
    %cst_12 = arith.constant 0.000000e+00 : f32
    %18 = vector.broadcast %cst_12 : f32 to vector<8x128xf32>
    %19 = arith.maximumf %17, %18 : vector<8x128xf32>
    %20 = arith.truncf %19 : vector<8x128xf32> to vector<8x128xbf16>
    %c0_13 = arith.constant 0 : index
    %c0_14 = arith.constant 0 : index
    %21 = vector.load %arg6[%c0_13, %c0_14] : memref<8x128xbf16, #tpu.memory_space<vmem>>, vector<8x128xbf16>
    tpu.vector_store %arg6[%c0_13, %c0_14], %20 {strides = array<i32>} : memref<8x128xbf16, #tpu.memory_space<vmem>>, vector<8x128xbf16>,
    return
  }
  func.func @transform_0(%arg0: i32) -> (i32, i32) {
    %c0_i32 = arith.constant 0 : i32
    %c0_i32_0 = arith.constant 0 : i32
    return %arg0, %c0_i32 : i32, i32
  }
  func.func @transform_1(%arg0: i32) -> (i32, i32) {
    %c0_i32 = arith.constant 0 : i32
    %c0_i32_0 = arith.constant 0 : i32
    %c0_i32_1 = arith.constant 0 : i32
    return %c0_i32, %c0_i32_0 : i32, i32
  }
  func.func @transform_2(%arg0: i32) -> (i32, i32) {
    %c0_i32 = arith.constant 0 : i32
    %c0_i32_0 = arith.constant 0 : i32
    %c0_i32_1 = arith.constant 0 : i32
    return %c0_i32, %c0_i32_0 : i32, i32
  }
  func.func @transform_3(%arg0: i32) -> (i32, i32) {
    %c0_i32 = arith.constant 0 : i32
    %c0_i32_0 = arith.constant 0 : i32
    %c0_i32_1 = arith.constant 0 : i32
    return %c0_i32, %c0_i32_0 : i32, i32
  }
  func.func @transform_4(%arg0: i32) -> (i32, i32) {
    %c0_i32 = arith.constant 0 : i32
    %c0_i32_0 = arith.constant 0 : i32
    %c0_i32_1 = arith.constant 0 : i32
    return %c0_i32, %c0_i32_0 : i32, i32
  }
  func.func @transform_5(%arg0: i32) -> (i32, i32) {
    %c0_i32 = arith.constant 0 : i32
    %c0_i32_0 = arith.constant 0 : i32
    return %arg0, %c0_i32 : i32, i32
  }
}

</mosaic_0001>

<llo_original>
// kernel: tpu_custom_call.1
$region0: #{tpu_custom_call.1}
  #allocation0 [shape = 'u32[]', space=smem, size = 0x4, offset = 0x4, fixed_abs, tag = 'smem constant byte address 0x4 - core index']
  #allocation1 [shape = 'u32[144,128]{1,0:T(1,128)}', space=vmem, size = 0x12000, scoped, tag = 'internal scratch']
  %s0 = inlined_call_operand.hbm [shape: f32[8,16], index: 0, kind: input, shape index: {}]
  %s1 = inlined_call_operand.hbm [shape: bf16[16,128], index: 1, kind: input, shape index: {}]
  %s2 = inlined_call_operand.vmem [shape: f32[1,128], index: 2, kind: input, shape index: {}]
  %s3 = inlined_call_operand.hbm [shape: bf16[128,128], index: 3, kind: input, shape index: {}]
  %s4 = inlined_call_operand.vmem [shape: f32[1,128], index: 4, kind: input, shape index: {}]
  %s5 = inlined_call_operand.hbm [shape: bf16[8,128], index: 5, kind: output, shape index: {}]
  %s6 = sld [smem:[#allocation0]]
  $region42: #{tpu_custom_call.1} parent=0
    _
  %s8 = ssub.s32 1, %s6
  %s9 = scalar_select 0, %s8, %s6
  $region1: #{tpu_custom_call.1} parent=0
    #allocation2 [shape = 'u8[4096]{0}', space=vmem, size = 0x1000, scoped, tag = 'input window, operand 0, single buffered']
    #allocation3 [shape = 's32[1]{0}', space=sflag, size = 0x4, scoped, tag = 'scoped memory for tpu_custom_call.1']
    #allocation4 [shape = 's32[1]{0}', space=sflag, size = 0x4, scoped, tag = 'scoped memory for tpu_custom_call.1']
    #allocation5 [shape = 'u8[4096]{0}', space=vmem, size = 0x1000, scoped, tag = 'input window, operand 1, single buffered']
    #allocation6 [shape = 's32[1]{0}', space=sflag, size = 0x4, scoped, tag = 'scoped memory for tpu_custom_call.1']
    #allocation7 [shape = 'u8[32768]{0}', space=vmem, size = 0x8000, scoped, tag = 'input window, operand 3, single buffered']
    #allocation8 [shape = 'u8[2048]{0}', space=vmem, size = 0x800, scoped, tag = 'output window, operand 0, single buffered']
    %10 = vsyncpa [#allocation3], 0
    %11 = vsyncpa [#allocation6], 0
    %12 = vsyncpa [#allocation4], 0
    // Predicated region
    $region2: #{tpu_custom_call.1} parent=1 // pred_check
      _
    $region3: #{tpu_custom_call.1} parent=1 // pred_check_branch
      %14 = sbr.rel (0) target = $region5
    $region4: #{tpu_custom_call.1} parent=1 // pred_region
      %s16 = ssub.s32 128, 128
      %17 = vsyncadd [#allocation3], %s16
      %s19 = sshll.u32 [#allocation2], 4
      %s20 = int_to_ptr.vmem [resolvable:$true] %s19
      %22 = dma.hbm_to_vmem [thread:$0]  %s0, 128, %s20, [#allocation3]
    $region5: #{tpu_custom_call.1} parent=1 // pred_fallthru
      _
    // Predicated region
    $region6: #{tpu_custom_call.1} parent=1 // pred_check
      _
    $region7: #{tpu_custom_call.1} parent=1 // pred_check_branch
      %24 = sbr.rel (0) target = $region9
    $region8: #{tpu_custom_call.1} parent=1 // pred_region
      %s26 = ssub.s32 128, 128
      %27 = vsyncadd [#allocation6], %s26
      %s28 = sshll.u32 [#allocation5], 4
      %s29 = int_to_ptr.vmem [resolvable:$true] %s28
      %34 = dma.hbm_to_vmem [thread:$0]  %s1, 128, %s29, [#allocation6], 64, 64, 4
    $region9: #{tpu_custom_call.1} parent=1 // pred_fallthru
      _
    // Predicated region
    $region10: #{tpu_custom_call.1} parent=1 // pred_check
      _
    $region11: #{tpu_custom_call.1} parent=1 // pred_check_branch
      %36 = sbr.rel (0) target = $region13
    $region12: #{tpu_custom_call.1} parent=1 // pred_region
      _
    $region13: #{tpu_custom_call.1} parent=1 // pred_fallthru
      _
    // Predicated region
    $region14: #{tpu_custom_call.1} parent=1 // pred_check
      _
    $region15: #{tpu_custom_call.1} parent=1 // pred_check_branch
      %38 = sbr.rel (0) target = $region17
    $region16: #{tpu_custom_call.1} parent=1 // pred_region
      %s40 = ssub.s32 1024, 1024
      %41 = vsyncadd [#allocation6], %s40
      %s42 = sshll.u32 [#allocation7], 4
      %s43 = int_to_ptr.vmem [resolvable:$true] %s42
      %48 = dma.hbm_to_vmem [thread:$0]  %s3, 1024, %s43, [#allocation6], 64, 64, 4
    $region17: #{tpu_custom_call.1} parent=1 // pred_fallthru
      _
    // Predicated region
    $region18: #{tpu_custom_call.1} parent=1 // pred_check
      _
    $region19: #{tpu_custom_call.1} parent=1 // pred_check_branch
      %50 = sbr.rel (0) target = $region21
    $region20: #{tpu_custom_call.1} parent=1 // pred_region
      _
    $region21: #{tpu_custom_call.1} parent=1 // pred_fallthru
      _
    // Predicated region
    $region22: #{tpu_custom_call.1} parent=1 // pred_check
      _
    $region23: #{tpu_custom_call.1} parent=1 // pred_check_branch
      %52 = sbr.rel (0) target = $region25
    $region24: #{tpu_custom_call.1} parent=1 // pred_region
      %53 = dma.done [#allocation3], 128
    $region25: #{tpu_custom_call.1} parent=1 // pred_fallthru
      _
    // Predicated region
    $region26: #{tpu_custom_call.1} parent=1 // pred_check
      _
    $region27: #{tpu_custom_call.1} parent=1 // pred_check_branch
      %55 = sbr.rel (0) target = $region29
    $region28: #{tpu_custom_call.1} parent=1 // pred_region
      %56 = dma.done [#allocation6], 128
    $region29: #{tpu_custom_call.1} parent=1 // pred_fallthru
      _
    // Predicated region
    $region30: #{tpu_custom_call.1} parent=1 // pred_check
      _
    $region31: #{tpu_custom_call.1} parent=1 // pred_check_branch
      %58 = sbr.rel (0) target = $region33
    $region32: #{tpu_custom_call.1} parent=1 // pred_region
      %59 = dma.done [#allocation6], 1024
    $region33: #{tpu_custom_call.1} parent=1 // pred_fallthru
      _
    %v61 = vld [vmem:[#allocation2] sm:$0xff]
    %v62 = vpack.c.bf16 %v61, %v61
    %v63 = vld [vmem:[#allocation5] sm:$0xf]
    %v64 = vld [vmem:[#allocation5 + $0x4] sm:$0xf]
    %v65 = vld [vmem:[%s2] sm:$0x1]
    %v67 = vlaneseq
    %v68 = vshrl.u32 %v67, 7
    %v69 = vsub.s32 0, %v68
    %v70 = vrot.slane %v65, %v69
    %v74 = vunpack.c.l.b16 %v63
    %v75 = vunpack.c.l.b16 %v64
    %v76 = vpack.c.b16 %v75, %v74
    %vm78 = vcmask 130048
    %v80 = vsel %vm78, %v62, 0
    %82 = vmatprep.subr.bf16.mxu0 0
    %83 = vmatpush1.bf16.msra.mxu0 %v76
    %84 = vmatprep.subr.bf16.mxu0 0
    %85 = vmatpush1.bf16.msra.mxu0 0
    %86 = vmatprep.subr.bf16.mxu0 0
    %87 = vmatpush1.bf16.msra.mxu0 0
    %88 = vmatprep.subr.bf16.mxu0 0
    %89 = vmatpush1.bf16.msra.mxu0 0
    %90 = vmatprep.subr.bf16.mxu0 0
    %91 = vmatpush1.bf16.msra.mxu0 0
    %92 = vmatprep.subr.bf16.mxu0 0
    %93 = vmatpush1.bf16.msra.mxu0 0
    %94 = vmatprep.subr.bf16.mxu0 0
    %95 = vmatpush1.bf16.msra.mxu0 0
    %96 = vmatprep.subr.bf16.mxu0 0
    %97 = vmatpush1.bf16.msra.mxu0 0
    %98 = vmatprep.subr.bf16.mxu0 0
    %99 = vmatpush1.bf16.msra.mxu0 0
    %100 = vmatprep.subr.bf16.mxu0 0
    %101 = vmatpush1.bf16.msra.mxu0 0
    %102 = vmatprep.subr.bf16.mxu0 0
    %103 = vmatpush1.bf16.msra.mxu0 0
    %104 = vmatprep.subr.bf16.mxu0 0
    %105 = vmatpush1.bf16.msra.mxu0 0
    %106 = vmatprep.subr.bf16.mxu0 0
    %107 = vmatpush1.bf16.msra.mxu0 0
    %108 = vmatprep.subr.bf16.mxu0 0
    %109 = vmatpush1.bf16.msra.mxu0 0
    %110 = vmatprep.subr.bf16.mxu0 0
    %111 = vmatpush1.bf16.msra.mxu0 0
    %112 = vmatprep.subr.bf16.mxu0 0
    %113 = vmatpush1.bf16.msra.mxu0 0
    %114 = vmatprep.mubr.bf16.mxu0 0
    %115 = vmatmul.mubr.bf16.gmra.mrb[0].mxu0 %v80
    %v116 = vpop.f32.mrb[0].mxu0
    %v117 = vadd.f32 %v70, %v116
    %v118 = vpop.f32.mrb[0].mxu0
    %v119 = vpop.f32.mrb[0].mxu0
    %v120 = vpop.f32.mrb[0].mxu0
    %121 = vdwg.mxu0
    %vm122 = vcmp.gt.f32.partialorder %v117, 0.0
    %v123 = vmul.f32 %v117, 0.01
    %v124 = vsel %vm122, %v117, %v123
    %v125 = vpack.c.bf16 %v124, %v124
    %v126 = vld [vmem:[#allocation7] sm:$0xf]
    %v127 = vld [vmem:[#allocation7 + $0x4] sm:$0xf]
    %v128 = vld [vmem:[#allocation7 + $0x8] sm:$0xf]
    %v129 = vld [vmem:[#allocation7 + $0xc] sm:$0xf]
    %v130 = vld [vmem:[#allocation7 + $0x10] sm:$0xf]
    %v131 = vld [vmem:[#allocation7 + $0x14] sm:$0xf]
    %v132 = vld [vmem:[#allocation7 + $0x18] sm:$0xf]
    %v133 = vld [vmem:[#allocation7 + $0x1c] sm:$0xf]
    %v134 = vld [vmem:[#allocation7 + $0x20] sm:$0xf]
    %v135 = vld [vmem:[#allocation7 + $0x24] sm:$0xf]
    %v136 = vld [vmem:[#allocation7 + $0x28] sm:$0xf]
    %v137 = vld [vmem:[#allocation7 + $0x2c] sm:$0xf]
    %v138 = vld [vmem:[#allocation7 + $0x30] sm:$0xf]
    %v139 = vld [vmem:[#allocation7 + $0x34] sm:$0xf]
    %v140 = vld [vmem:[#allocation7 + $0x38] sm:$0xf]
    %v141 = vld [vmem:[#allocation7 + $0x3c] sm:$0xf]
    %v142 = vld [vmem:[%s4] sm:$0x1]
    %v144 = vlaneseq
    %v145 = vshrl.u32 %v144, 7
    %v146 = vsub.s32 0, %v145
    %v147 = vrot.slane %v142, %v146
    %v165 = vunpack.c.l.b16 %v126
    %v166 = vunpack.c.l.b16 %v127
    %v167 = vunpack.c.l.b16 %v128
    %v168 = vunpack.c.l.b16 %v129
    %v169 = vunpack.c.l.b16 %v130
    %v170 = vunpack.c.l.b16 %v131
    %v171 = vunpack.c.l.b16 %v132
    %v172 = vunpack.c.l.b16 %v133
    %v173 = vunpack.c.l.b16 %v134
    %v174 = vunpack.c.l.b16 %v135
    %v175 = vunpack.c.l.b16 %v136
    %v176 = vunpack.c.l.b16 %v137
    %v177 = vunpack.c.l.b16 %v138
    %v178 = vunpack.c.l.b16 %v139
    %v179 = vunpack.c.l.b16 %v140
    %v180 = vunpack.c.l.b16 %v141
    %v181 = vpack.c.b16 %v166, %v165
    %v182 = vpack.c.b16 %v168, %v167
    %v183 = vpack.c.b16 %v170, %v169
    %v184 = vpack.c.b16 %v172, %v171
    %v185 = vpack.c.b16 %v174, %v173
    %v186 = vpack.c.b16 %v176, %v175
    %v187 = vpack.c.b16 %v178, %v177
    %v188 = vpack.c.b16 %v180, %v179
    %197 = vmatprep.subr.bf16.mxu0 0
    %198 = vmatpush1.bf16.msra.mxu0 %v181
    %199 = vmatprep.subr.bf16.mxu0 0
    %200 = vmatpush1.bf16.msra.mxu0 %v182
    %201 = vmatprep.subr.bf16.mxu0 0
    %202 = vmatpush1.bf16.msra.mxu0 %v183
    %203 = vmatprep.subr.bf16.mxu0 0
    %204 = vmatpush1.bf16.msra.mxu0 %v184
    %205 = vmatprep.subr.bf16.mxu0 0
    %206 = vmatpush1.bf16.msra.mxu0 %v185
    %207 = vmatprep.subr.bf16.mxu0 0
    %208 = vmatpush1.bf16.msra.mxu0 %v186
    %209 = vmatprep.subr.bf16.mxu0 0
    %210 = vmatpush1.bf16.msra.mxu0 %v187
    %211 = vmatprep.subr.bf16.mxu0 0
    %212 = vmatpush1.bf16.msra.mxu0 %v188
    %213 = vmatprep.subr.bf16.mxu0 0
    %214 = vmatpush1.bf16.msra.mxu0 0
    %215 = vmatprep.subr.bf16.mxu0 0
    %216 = vmatpush1.bf16.msra.mxu0 0
    %217 = vmatprep.subr.bf16.mxu0 0
    %218 = vmatpush1.bf16.msra.mxu0 0
    %219 = vmatprep.subr.bf16.mxu0 0
    %220 = vmatpush1.bf16.msra.mxu0 0
    %221 = vmatprep.subr.bf16.mxu0 0
    %222 = vmatpush1.bf16.msra.mxu0 0
    %223 = vmatprep.subr.bf16.mxu0 0
    %224 = vmatpush1.bf16.msra.mxu0 0
    %225 = vmatprep.subr.bf16.mxu0 0
    %226 = vmatpush1.bf16.msra.mxu0 0
    %227 = vmatprep.subr.bf16.mxu0 0
    %228 = vmatpush1.bf16.msra.mxu0 0
    %229 = vmatprep.mubr.bf16.mxu0 0
    %230 = vmatmul.mubr.bf16.gmra.mrb[0].mxu0 %v125
    %v231 = vpop.f32.mrb[0].mxu0
    %v232 = vadd.f32 %v147, %v231
    %v233 = vpop.f32.mrb[0].mxu0
    %v234 = vpop.f32.mrb[0].mxu0
    %v235 = vpop.f32.mrb[0].mxu0
    %236 = vdwg.mxu0
    %v237 = vmax.f32 %v232, 0.0
    %v238 = vpack.c.bf16 %v237, %v237
    %239 = vst [vmem:[#allocation8] sm:$0xf] %v238
    // Predicated region
    $region34: #{tpu_custom_call.1} parent=1 // pred_check
      _
    $region35: #{tpu_custom_call.1} parent=1 // pred_check_branch
      %241 = sbr.rel (0) target = $region37
    $region36: #{tpu_custom_call.1} parent=1 // pred_region
      %s243 = ssub.s32 64, 64
      %244 = vsyncadd [#allocation4], %s243
      %s246 = sshll.u32 [#allocation8], 4
      %s247 = int_to_ptr.vmem [resolvable:$true] %s246
      %249 = dma.vmem_to_hbm [thread:$0]  %s247, 64, %s5, [#allocation4]
    $region37: #{tpu_custom_call.1} parent=1 // pred_fallthru
      _
    // Predicated region
    $region38: #{tpu_custom_call.1} parent=1 // pred_check
      _
    $region39: #{tpu_custom_call.1} parent=1 // pred_check_branch
      %251 = sbr.rel (0) target = $region41
    $region40: #{tpu_custom_call.1} parent=1 // pred_region
      %252 = dma.done [#allocation4], 64
    $region41: #{tpu_custom_call.1} parent=1 // pred_fallthru
      _
    %253 = vsyncpa [#allocation3], 1
    %254 = vsyncpa [#allocation6], 1
    %255 = vsyncpa [#allocation4], 1

// kernel: tpu_custom_call.1
$region0: #{tpu_custom_call.1}
  #allocation0 [shape = 'u32[]', space=smem, size = 0x4, offset = 0x4, fixed_abs, tag = 'smem constant byte address 0x4 - core index']
  #allocation1 [shape = 'u32[144,128]{1,0:T(1,128)}', space=vmem, size = 0x12000, scoped, tag = 'internal scratch']
  %s0 = inlined_call_operand.hbm [shape: f32[8,16], index: 0, kind: input, shape index: {}]
  %s1 = inlined_call_operand.hbm [shape: bf16[16,128], index: 1, kind: input, shape index: {}]
  %s2 = inlined_call_operand.vmem [shape: f32[1,128], index: 2, kind: input, shape index: {}]
  %s3 = inlined_call_operand.hbm [shape: bf16[128,128], index: 3, kind: input, shape index: {}]
  %s4 = inlined_call_operand.vmem [shape: f32[1,128], index: 4, kind: input, shape index: {}]
  %s5 = inlined_call_operand.hbm [shape: bf16[8,128], index: 5, kind: output, shape index: {}]
  %s6 = sld [smem:[#allocation0]]
  $region42: #{tpu_custom_call.1} parent=0
    _
  %s8 = ssub.s32 1, %s6
  %s9 = scalar_select 0, %s8, %s6
  $region1: #{tpu_custom_call.1} parent=0
    #allocation2 [shape = 'u8[4096]{0}', space=vmem, size = 0x1000, scoped, tag = 'input window, operand 0, single buffered']
    #allocation3 [shape = 's32[1]{0}', space=sflag, size = 0x4, scoped, tag = 'scoped memory for tpu_custom_call.1']
    #allocation4 [shape = 's32[1]{0}', space=sflag, size = 0x4, scoped, tag = 'scoped memory for tpu_custom_call.1']
    #allocation5 [shape = 'u8[4096]{0}', space=vmem, size = 0x1000, scoped, tag = 'input window, operand 1, single buffered']
    #allocation6 [shape = 's32[1]{0}', space=sflag, size = 0x4, scoped, tag = 'scoped memory for tpu_custom_call.1']
    #allocation7 [shape = 'u8[32768]{0}', space=vmem, size = 0x8000, scoped, tag = 'input window, operand 3, single buffered']
    #allocation8 [shape = 'u8[2048]{0}', space=vmem, size = 0x800, scoped, tag = 'output window, operand 0, single buffered']
    %10 = vsyncpa [#allocation3], 0
    %11 = vsyncpa [#allocation6], 0
    %12 = vsyncpa [#allocation4], 0
    // Predicated region
    $region2: #{tpu_custom_call.1} parent=1 // pred_check
      _
    $region3: #{tpu_custom_call.1} parent=1 // pred_check_branch
      %14 = sbr.rel (0) target = $region5
    $region4: #{tpu_custom_call.1} parent=1 // pred_region
      %s16 = ssub.s32 128, 128
      %17 = vsyncadd [#allocation3], %s16
      %s19 = sshll.u32 [#allocation2], 4
      %s20 = int_to_ptr.vmem [resolvable:$true] %s19
      %22 = dma.hbm_to_vmem [thread:$0]  %s0, 128, %s20, [#allocation3]
    $region5: #{tpu_custom_call.1} parent=1 // pred_fallthru
      _
    // Predicated region
    $region6: #{tpu_custom_call.1} parent=1 // pred_check
      _
    $region7: #{tpu_custom_call.1} parent=1 // pred_check_branch
      %24 = sbr.rel (0) target = $region9
    $region8: #{tpu_custom_call.1} parent=1 // pred_region
      %s26 = ssub.s32 128, 128
      %27 = vsyncadd [#allocation6], %s26
      %s28 = sshll.u32 [#allocation5], 4
      %s29 = int_to_ptr.vmem [resolvable:$true] %s28
      %34 = dma.hbm_to_vmem [thread:$0]  %s1, 128, %s29, [#allocation6], 64, 64, 4
    $region9: #{tpu_custom_call.1} parent=1 // pred_fallthru
      _
    // Predicated region
    $region10: #{tpu_custom_call.1} parent=1 // pred_check
      _
    $region11: #{tpu_custom_call.1} parent=1 // pred_check_branch
      %36 = sbr.rel (0) target = $region13
    $region12: #{tpu_custom_call.1} parent=1 // pred_region
      _
    $region13: #{tpu_custom_call.1} parent=1 // pred_fallthru
      _
    // Predicated region
    $region14: #{tpu_custom_call.1} parent=1 // pred_check
      _
    $region15: #{tpu_custom_call.1} parent=1 // pred_check_branch
      %38 = sbr.rel (0) target = $region17
    $region16: #{tpu_custom_call.1} parent=1 // pred_region
      %s40 = ssub.s32 1024, 1024
      %41 = vsyncadd [#allocation6], %s40
      %s42 = sshll.u32 [#allocation7], 4
      %s43 = int_to_ptr.vmem [resolvable:$true] %s42
      %48 = dma.hbm_to_vmem [thread:$0]  %s3, 1024, %s43, [#allocation6], 64, 64, 4
    $region17: #{tpu_custom_call.1} parent=1 // pred_fallthru
      _
    // Predicated region
    $region18: #{tpu_custom_call.1} parent=1 // pred_check
      _
    $region19: #{tpu_custom_call.1} parent=1 // pred_check_branch
      %50 = sbr.rel (0) target = $region21
    $region20: #{tpu_custom_call.1} parent=1 // pred_region
      _
    $region21: #{tpu_custom_call.1} parent=1 // pred_fallthru
      _
    // Predicated region
    $region22: #{tpu_custom_call.1} parent=1 // pred_check
      _
    $region23: #{tpu_custom_call.1} parent=1 // pred_check_branch
      %52 = sbr.rel (0) target = $region25
    $region24: #{tpu_custom_call.1} parent=1 // pred_region
      %53 = dma.done [#allocation3], 128
    $region25: #{tpu_custom_call.1} parent=1 // pred_fallthru
      _
    // Predicated region
    $region26: #{tpu_custom_call.1} parent=1 // pred_check
      _
    $region27: #{tpu_custom_call.1} parent=1 // pred_check_branch
      %55 = sbr.rel (0) target = $region29
    $region28: #{tpu_custom_call.1} parent=1 // pred_region
      %56 = dma.done [#allocation6], 128
    $region29: #{tpu_custom_call.1} parent=1 // pred_fallthru
      _
    // Predicated region
    $region30: #{tpu_custom_call.1} parent=1 // pred_check
      _
    $region31: #{tpu_custom_call.1} parent=1 // pred_check_branch
      %58 = sbr.rel (0) target = $region33
    $region32: #{tpu_custom_call.1} parent=1 // pred_region
      %59 = dma.done [#allocation6], 1024
    $region33: #{tpu_custom_call.1} parent=1 // pred_fallthru
      _
    %v61 = vld [vmem:[#allocation2] sm:$0xff]
    %v62 = vpack.c.bf16 %v61, %v61
    %v63 = vld [vmem:[#allocation5] sm:$0xf]
    %v64 = vld [vmem:[#allocation5 + $0x4] sm:$0xf]
    %v65 = vld [vmem:[%s2] sm:$0x1]
    %v67 = vlaneseq
    %v68 = vshrl.u32 %v67, 7
    %v69 = vsub.s32 0, %v68
    %v70 = vrot.slane %v65, %v69
    %v74 = vunpack.c.l.b16 %v63
    %v75 = vunpack.c.l.b16 %v64
    %v76 = vpack.c.b16 %v75, %v74
    %vm78 = vcmask 130048
    %v80 = vsel %vm78, %v62, 0
    %82 = vmatprep.subr.bf16.mxu0 0
    %83 = vmatpush1.bf16.msra.mxu0 %v76
    %84 = vmatprep.subr.bf16.mxu0 0
    %85 = vmatpush1.bf16.msra.mxu0 0
    %86 = vmatprep.subr.bf16.mxu0 0
    %87 = vmatpush1.bf16.msra.mxu0 0
    %88 = vmatprep.subr.bf16.mxu0 0
    %89 = vmatpush1.bf16.msra.mxu0 0
    %90 = vmatprep.subr.bf16.mxu0 0
    %91 = vmatpush1.bf16.msra.mxu0 0
    %92 = vmatprep.subr.bf16.mxu0 0
    %93 = vmatpush1.bf16.msra.mxu0 0
    %94 = vmatprep.subr.bf16.mxu0 0
    %95 = vmatpush1.bf16.msra.mxu0 0
    %96 = vmatprep.subr.bf16.mxu0 0
    %97 = vmatpush1.bf16.msra.mxu0 0
    %98 = vmatprep.subr.bf16.mxu0 0
    %99 = vmatpush1.bf16.msra.mxu0 0
    %100 = vmatprep.subr.bf16.mxu0 0
    %101 = vmatpush1.bf16.msra.mxu0 0
    %102 = vmatprep.subr.bf16.mxu0 0
    %103 = vmatpush1.bf16.msra.mxu0 0
    %104 = vmatprep.subr.bf16.mxu0 0
    %105 = vmatpush1.bf16.msra.mxu0 0
    %106 = vmatprep.subr.bf16.mxu0 0
    %107 = vmatpush1.bf16.msra.mxu0 0
    %108 = vmatprep.subr.bf16.mxu0 0
    %109 = vmatpush1.bf16.msra.mxu0 0
    %110 = vmatprep.subr.bf16.mxu0 0
    %111 = vmatpush1.bf16.msra.mxu0 0
    %112 = vmatprep.subr.bf16.mxu0 0
    %113 = vmatpush1.bf16.msra.mxu0 0
    %114 = vmatprep.mubr.bf16.mxu0 0
    %115 = vmatmul.mubr.bf16.gmra.mrb[0].mxu0 %v80
    %v116 = vpop.f32.mrb[0].mxu0
    %v117 = vadd.f32 %v70, %v116
    %v118 = vpop.f32.mrb[0].mxu0
    %v119 = vpop.f32.mrb[0].mxu0
    %v120 = vpop.f32.mrb[0].mxu0
    %121 = vdwg.mxu0
    %vm122 = vcmp.gt.f32.partialorder %v117, 0.0
    %v123 = vmul.f32 %v117, 0.01
    %v124 = vsel %vm122, %v117, %v123
    %v125 = vpack.c.bf16 %v124, %v124
    %v126 = vld [vmem:[#allocation7] sm:$0xf]
    %v127 = vld [vmem:[#allocation7 + $0x4] sm:$0xf]
    %v128 = vld [vmem:[#allocation7 + $0x8] sm:$0xf]
    %v129 = vld [vmem:[#allocation7 + $0xc] sm:$0xf]
    %v130 = vld [vmem:[#allocation7 + $0x10] sm:$0xf]
    %v131 = vld [vmem:[#allocation7 + $0x14] sm:$0xf]
    %v132 = vld [vmem:[#allocation7 + $0x18] sm:$0xf]
    %v133 = vld [vmem:[#allocation7 + $0x1c] sm:$0xf]
    %v134 = vld [vmem:[#allocation7 + $0x20] sm:$0xf]
    %v135 = vld [vmem:[#allocation7 + $0x24] sm:$0xf]
    %v136 = vld [vmem:[#allocation7 + $0x28] sm:$0xf]
    %v137 = vld [vmem:[#allocation7 + $0x2c] sm:$0xf]
    %v138 = vld [vmem:[#allocation7 + $0x30] sm:$0xf]
    %v139 = vld [vmem:[#allocation7 + $0x34] sm:$0xf]
    %v140 = vld [vmem:[#allocation7 + $0x38] sm:$0xf]
    %v141 = vld [vmem:[#allocation7 + $0x3c] sm:$0xf]
    %v142 = vld [vmem:[%s4] sm:$0x1]
    %v144 = vlaneseq
    %v145 = vshrl.u32 %v144, 7
    %v146 = vsub.s32 0, %v145
    %v147 = vrot.slane %v142, %v146
    %v165 = vunpack.c.l.b16 %v126
    %v166 = vunpack.c.l.b16 %v127
    %v167 = vunpack.c.l.b16 %v128
    %v168 = vunpack.c.l.b16 %v129
    %v169 = vunpack.c.l.b16 %v130
    %v170 = vunpack.c.l.b16 %v131
    %v171 = vunpack.c.l.b16 %v132
    %v172 = vunpack.c.l.b16 %v133
    %v173 = vunpack.c.l.b16 %v134
    %v174 = vunpack.c.l.b16 %v135
    %v175 = vunpack.c.l.b16 %v136
    %v176 = vunpack.c.l.b16 %v137
    %v177 = vunpack.c.l.b16 %v138
    %v178 = vunpack.c.l.b16 %v139
    %v179 = vunpack.c.l.b16 %v140
    %v180 = vunpack.c.l.b16 %v141
    %v181 = vpack.c.b16 %v166, %v165
    %v182 = vpack.c.b16 %v168, %v167
    %v183 = vpack.c.b16 %v170, %v169
    %v184 = vpack.c.b16 %v172, %v171
    %v185 = vpack.c.b16 %v174, %v173
    %v186 = vpack.c.b16 %v176, %v175
    %v187 = vpack.c.b16 %v178, %v177
    %v188 = vpack.c.b16 %v180, %v179
    %197 = vmatprep.subr.bf16.mxu0 0
    %198 = vmatpush1.bf16.msra.mxu0 %v181
    %199 = vmatprep.subr.bf16.mxu0 0
    %200 = vmatpush1.bf16.msra.mxu0 %v182
    %201 = vmatprep.subr.bf16.mxu0 0
    %202 = vmatpush1.bf16.msra.mxu0 %v183
    %203 = vmatprep.subr.bf16.mxu0 0
    %204 = vmatpush1.bf16.msra.mxu0 %v184
    %205 = vmatprep.subr.bf16.mxu0 0
    %206 = vmatpush1.bf16.msra.mxu0 %v185
    %207 = vmatprep.subr.bf16.mxu0 0
    %208 = vmatpush1.bf16.msra.mxu0 %v186
    %209 = vmatprep.subr.bf16.mxu0 0
    %210 = vmatpush1.bf16.msra.mxu0 %v187
    %211 = vmatprep.subr.bf16.mxu0 0
    %212 = vmatpush1.bf16.msra.mxu0 %v188
    %213 = vmatprep.subr.bf16.mxu0 0
    %214 = vmatpush1.bf16.msra.mxu0 0
    %215 = vmatprep.subr.bf16.mxu0 0
    %216 = vmatpush1.bf16.msra.mxu0 0
    %217 = vmatprep.subr.bf16.mxu0 0
    %218 = vmatpush1.bf16.msra.mxu0 0
    %219 = vmatprep.subr.bf16.mxu0 0
    %220 = vmatpush1.bf16.msra.mxu0 0
    %221 = vmatprep.subr.bf16.mxu0 0
    %222 = vmatpush1.bf16.msra.mxu0 0
    %223 = vmatprep.subr.bf16.mxu0 0
    %224 = vmatpush1.bf16.msra.mxu0 0
    %225 = vmatprep.subr.bf16.mxu0 0
    %226 = vmatpush1.bf16.msra.mxu0 0
    %227 = vmatprep.subr.bf16.mxu0 0
    %228 = vmatpush1.bf16.msra.mxu0 0
    %229 = vmatprep.mubr.bf16.mxu0 0
    %230 = vmatmul.mubr.bf16.gmra.mrb[0].mxu0 %v125
    %v231 = vpop.f32.mrb[0].mxu0
    %v232 = vadd.f32 %v147, %v231
    %v233 = vpop.f32.mrb[0].mxu0
    %v234 = vpop.f32.mrb[0].mxu0
    %v235 = vpop.f32.mrb[0].mxu0
    %236 = vdwg.mxu0
    %v237 = vmax.f32 %v232, 0.0
    %v238 = vpack.c.bf16 %v237, %v237
    %239 = vst [vmem:[#allocation8] sm:$0xf] %v238
    // Predicated region
    $region34: #{tpu_custom_call.1} parent=1 // pred_check
      _
    $region35: #{tpu_custom_call.1} parent=1 // pred_check_branch
      %241 = sbr.rel (0) target = $region37
    $region36: #{tpu_custom_call.1} parent=1 // pred_region
      %s243 = ssub.s32 64, 64
      %244 = vsyncadd [#allocation4], %s243
      %s246 = sshll.u32 [#allocation8], 4
      %s247 = int_to_ptr.vmem [resolvable:$true] %s246
      %249 = dma.vmem_to_hbm [thread:$0]  %s247, 64, %s5, [#allocation4]
    $region37: #{tpu_custom_call.1} parent=1 // pred_fallthru
      _
    // Predicated region
    $region38: #{tpu_custom_call.1} parent=1 // pred_check
      _
    $region39: #{tpu_custom_call.1} parent=1 // pred_check_branch
      %251 = sbr.rel (0) target = $region41
    $region40: #{tpu_custom_call.1} parent=1 // pred_region
      %252 = dma.done [#allocation4], 64
    $region41: #{tpu_custom_call.1} parent=1 // pred_fallthru
      _
    %253 = vsyncpa [#allocation3], 1
    %254 = vsyncpa [#allocation6], 1
    %255 = vsyncpa [#allocation4], 1

</llo_original>
